<compile_context>
chip_gen: v5e
topology: v5e:2x2
jax: 0.10.0
libtpu: 0.0.40
codegen_flags: <defaults>
</compile_context>

<pallas_src>
import jax
import jax.numpy as jnp
from jax.experimental import pallas as pl
from jax.experimental.pallas import tpu as pltpu


def _round_up(n, m):
    return ((n + m - 1) // m) * m


def mlp_kernel(x_ref, w1_ref, b1_ref, w2_ref, b2_ref, w3_ref, b3_ref, o_ref):
    """x_ref: (IN, TR, 128) VMEM block (batch packed over sublanes+lanes).
    w*_ref: (out, in) SMEM, b*_ref: (out,) SMEM.  o_ref: (OUT, TR, 128) VMEM."""
    in_f = x_ref.shape[0]
    # One dense (TR, 128) slab per input feature.
    rows = [x_ref[k] for k in range(in_f)]

    def layer(rows_in, w_ref, b_ref, relu):
        out_f, k_f = w_ref.shape
        outs = []
        for j in range(out_f):                          # fully unrolled (<= 6)
            # Bias folded into the first MAC (one fewer VALU add per output).
            acc = rows_in[0] * w_ref[j, 0] + b_ref[j]
            for k in range(1, k_f):
                acc = acc + rows_in[k] * w_ref[j, k]    # VPU scalar-broadcast MAC
            if relu:
                acc = jnp.maximum(acc, 0.0)
            outs.append(acc)
        return outs

    h1 = layer(rows, w1_ref, b1_ref, relu=True)
    h2 = layer(h1, w2_ref, b2_ref, relu=True)
    out = layer(h2, w3_ref, b3_ref, relu=False)
    for j, slab in enumerate(out):                      # dense, unmasked stores
        o_ref[j] = slab


def network_forward(x, params, *, max_tb=131072):
    """x: (B, input_size) f32. params: PyTorch-layout weights (out, in), biases (out,)."""
    w1, b1 = params["w1"], params["b1"]
    w2, b2 = params["w2"], params["b2"]
    w3, b3 = params["w3"], params["b3"]
    B, in_f = x.shape
    out_f = w3.shape[0]

    # Pad the batch only to the next multiple of 128 (lane width); zeros keep the
    # padded columns benign through the elementwise layers.
    b_pad = _round_up(max(B, 1), 128)
    nrows = b_pad // 128                                 # sublane rows of the batch

    # Feature-major, (in_f, nrows, 128) layout; jnp.pad avoids the full
    # zero-init + scatter of the previous version.
    # TODO(synk): keeping activations feature-major upstream would remove this
    # transpose and the final slice/transpose entirely.
    x_t = jnp.pad(x.T, ((0, 0), (0, b_pad - B))).reshape(in_f, nrows, 128)

    # Rows-per-tile: multiple of 8 sublanes, large enough to amortize per-step
    # overhead, but keep >= ~4 grid steps on big batches so v7x megacore can
    # split the "parallel" batch axis across both TensorCores.
    max_tr = max(8, (max_tb // 128) // 8 * 8)
    if nrows <= 8:
        tr = nrows                                       # block dim == full array dim
    else:
        tr = min(max_tr, _round_up(pl.cdiv(nrows, 4), 8))
    grid = (pl.cdiv(nrows, tr),)

    smem = pl.BlockSpec(memory_space=pltpu.MemorySpace.SMEM)

    out_t = pl.pallas_call(
        mlp_kernel,
        out_shape=jax.ShapeDtypeStruct((out_f, nrows, 128), jnp.float32),
        grid=grid,
        in_specs=[
            pl.BlockSpec((in_f, tr, 128), lambda i: (0, i, 0)),  # x tiled over batch rows
            smem, smem,                                          # w1, b1 (resident)
            smem, smem,                                          # w2, b2
            smem, smem,                                          # w3, b3
        ],
        out_specs=pl.BlockSpec((out_f, tr, 128), lambda i: (0, i, 0)),
        compiler_params=pltpu.CompilerParams(
            dimension_semantics=("parallel",),                   # megacore on v7x
            vmem_limit_bytes=32 * 1024 * 1024,                   # safe on v5e/v6e/v7x
        ),
    )(x_t, w1, b1, w2, b2, w3, b3)

    return out_t.reshape(out_f, b_pad)[:, :B].T


def init_params(key, input_size, output_size):
    """Deterministic init mimicking nn.Linear (uniform +/-1/sqrt(fan_in)),
    stored in PyTorch layout: W (out, in), b (out,)."""
    hidden1, hidden2 = 6, 3
    dims = [(input_size, hidden1), (hidden1, hidden2), (hidden2, output_size)]
    params = {}
    keys = jax.random.split(key, 6)
    for i, (fan_in, fan_out) in enumerate(dims, start=1):
        bound = 1.0 / jnp.sqrt(jnp.float32(fan_in))
        params[f"w{i}"] = jax.random.uniform(
            keys[2 * (i - 1)], (fan_out, fan_in), jnp.float32, -bound, bound)
        params[f"b{i}"] = jax.random.uniform(
            keys[2 * (i - 1) + 1], (fan_out,), jnp.float32, -bound, bound)
    return params


def reference_forward(x, params):
    h1 = jnp.maximum(x @ params["w1"].T + params["b1"], 0.0)
    h2 = jnp.maximum(h1 @ params["w2"].T + params["b2"], 0.0)
    return h2 @ params["w3"].T + params["b3"]


if __name__ == "__main__":
    key = jax.random.PRNGKey(0)
    k_x, k_p = jax.random.split(key)

    batch, input_size, output_size = 8, 4, 2
    x = jax.random.normal(k_x, (batch, input_size), dtype=jnp.float32)
    params = init_params(k_p, input_size, output_size)

    out = network_forward(x, params)
    out = jax.block_until_ready(out)

    ref = reference_forward(x, params)
    assert out.shape == (batch, output_size)
    assert jnp.allclose(out, ref, atol=1e-5, rtol=1e-5)

    print("KERNEL_OK")
</pallas_src>

<mosaic_0001>
module attributes {stable_mosaic.version = 11 : i64} {
  func.func @mlp_kernel(%arg0: i32, %arg1: memref<4x1x128xf32, #tpu.memory_space<vmem>>, %arg2: memref<6x4xf32, #tpu.memory_space<smem>>, %arg3: memref<6xf32, #tpu.memory_space<smem>>, %arg4: memref<3x6xf32, #tpu.memory_space<smem>>, %arg5: memref<3xf32, #tpu.memory_space<smem>>, %arg6: memref<2x3xf32, #tpu.memory_space<smem>>, %arg7: memref<2xf32, #tpu.memory_space<smem>>, %arg8: memref<2x1x128xf32, #tpu.memory_space<vmem>>) attributes {dimension_semantics = [#tpu.dimension_semantics<parallel>], iteration_bounds = array<i64: 1>, scalar_prefetch = 0 : i64, scratch_operands = 0 : i64, tpu.core_type = #tpu.core_type<tc>, window_params = [{transform_indices = @transform_0, window_bounds = array<i64: 4, 1, 128>}, {transform_indices = @transform_1, window_bounds = array<i64: 6, 4>}, {transform_indices = @transform_2, window_bounds = array<i64: 6>}, {transform_indices = @transform_3, window_bounds = array<i64: 3, 6>}, {transform_indices = @transform_4, window_bounds = array<i64: 3>}, {transform_indices = @transform_5, window_bounds = array<i64: 2, 3>}, {transform_indices = @transform_6, window_bounds = array<i64: 2>}, {transform_indices = @transform_7, window_bounds = array<i64: 2, 1, 128>}]} {
    %c0 = arith.constant 0 : index
    %c0_0 = arith.constant 0 : index
    %c0_1 = arith.constant 0 : index
    %0 = vector.load %arg1[%c0, %c0_0, %c0_1] : memref<4x1x128xf32, #tpu.memory_space<vmem>>, vector<1x1x128xf32>
    %1 = vector.shape_cast %0 : vector<1x1x128xf32> to vector<1x128xf32>
    %c1 = arith.constant 1 : index
    %c0_2 = arith.constant 0 : index
    %c0_3 = arith.constant 0 : index
    %2 = vector.load %arg1[%c1, %c0_2, %c0_3] : memref<4x1x128xf32, #tpu.memory_space<vmem>>, vector<1x1x128xf32>
    %3 = vector.shape_cast %2 : vector<1x1x128xf32> to vector<1x128xf32>
    %c2 = arith.constant 2 : index
    %c0_4 = arith.constant 0 : index
    %c0_5 = arith.constant 0 : index
    %4 = vector.load %arg1[%c2, %c0_4, %c0_5] : memref<4x1x128xf32, #tpu.memory_space<vmem>>, vector<1x1x128xf32>
    %5 = vector.shape_cast %4 : vector<1x1x128xf32> to vector<1x128xf32>
    %c3 = arith.constant 3 : index
    %c0_6 = arith.constant 0 : index
    %c0_7 = arith.constant 0 : index
    %6 = vector.load %arg1[%c3, %c0_6, %c0_7] : memref<4x1x128xf32, #tpu.memory_space<vmem>>, vector<1x1x128xf32>
    %7 = vector.shape_cast %6 : vector<1x1x128xf32> to vector<1x128xf32>
    %c0_8 = arith.constant 0 : index
    %c0_9 = arith.constant 0 : index
    %8 = memref.load %arg2[%c0_8, %c0_9] : memref<6x4xf32, #tpu.memory_space<smem>>
    %9 = vector.broadcast %8 : f32 to vector<1x128xf32>
    %10 = arith.mulf %1, %9 : vector<1x128xf32>
    %c0_10 = arith.constant 0 : index
    %11 = memref.load %arg3[%c0_10] : memref<6xf32, #tpu.memory_space<smem>>
    %12 = vector.broadcast %11 : f32 to vector<1x128xf32>
    %13 = arith.addf %10, %12 : vector<1x128xf32>
    %c0_11 = arith.constant 0 : index
    %c1_12 = arith.constant 1 : index
    %14 = memref.load %arg2[%c0_11, %c1_12] : memref<6x4xf32, #tpu.memory_space<smem>>
    %15 = vector.broadcast %14 : f32 to vector<1x128xf32>
    %16 = arith.mulf %3, %15 : vector<1x128xf32>
    %17 = arith.addf %13, %16 : vector<1x128xf32>
    %c0_13 = arith.constant 0 : index
    %c2_14 = arith.constant 2 : index
    %18 = memref.load %arg2[%c0_13, %c2_14] : memref<6x4xf32, #tpu.memory_space<smem>>
    %19 = vector.broadcast %18 : f32 to vector<1x128xf32>
    %20 = arith.mulf %5, %19 : vector<1x128xf32>
    %21 = arith.addf %17, %20 : vector<1x128xf32>
    %c0_15 = arith.constant 0 : index
    %c3_16 = arith.constant 3 : index
    %22 = memref.load %arg2[%c0_15, %c3_16] : memref<6x4xf32, #tpu.memory_space<smem>>
    %23 = vector.broadcast %22 : f32 to vector<1x128xf32>
    %24 = arith.mulf %7, %23 : vector<1x128xf32>
    %25 = arith.addf %21, %24 : vector<1x128xf32>
    %cst = arith.constant 0.000000e+00 : f32
    %26 = vector.broadcast %cst : f32 to vector<1x128xf32>
    %27 = arith.maximumf %25, %26 : vector<1x128xf32>
    %c1_17 = arith.constant 1 : index
    %c0_18 = arith.constant 0 : index
    %28 = memref.load %arg2[%c1_17, %c0_18] : memref<6x4xf32, #tpu.memory_space<smem>>
    %29 = vector.broadcast %28 : f32 to vector<1x128xf32>
    %30 = arith.mulf %1, %29 : vector<1x128xf32>
    %c1_19 = arith.constant 1 : index
    %31 = memref.load %arg3[%c1_19] : memref<6xf32, #tpu.memory_space<smem>>
    %32 = vector.broadcast %31 : f32 to vector<1x128xf32>
    %33 = arith.addf %30, %32 : vector<1x128xf32>
    %c1_20 = arith.constant 1 : index
    %c1_21 = arith.constant 1 : index
    %34 = memref.load %arg2[%c1_20, %c1_21] : memref<6x4xf32, #tpu.memory_space<smem>>
    %35 = vector.broadcast %34 : f32 to vector<1x128xf32>
    %36 = arith.mulf %3, %35 : vector<1x128xf32>
    %37 = arith.addf %33, %36 : vector<1x128xf32>
    %c1_22 = arith.constant 1 : index
    %c2_23 = arith.constant 2 : index
    %38 = memref.load %arg2[%c1_22, %c2_23] : memref<6x4xf32, #tpu.memory_space<smem>>
    %39 = vector.broadcast %38 : f32 to vector<1x128xf32>
    %40 = arith.mulf %5, %39 : vector<1x128xf32>
    %41 = arith.addf %37, %40 : vector<1x128xf32>
    %c1_24 = arith.constant 1 : index
    %c3_25 = arith.constant 3 : index
    %42 = memref.load %arg2[%c1_24, %c3_25] : memref<6x4xf32, #tpu.memory_space<smem>>
    %43 = vector.broadcast %42 : f32 to vector<1x128xf32>
    %44 = arith.mulf %7, %43 : vector<1x128xf32>
    %45 = arith.addf %41, %44 : vector<1x128xf32>
    %cst_26 = arith.constant 0.000000e+00 : f32
    %46 = vector.broadcast %cst_26 : f32 to vector<1x128xf32>
    %47 = arith.maximumf %45, %46 : vector<1x128xf32>
    %c2_27 = arith.constant 2 : index
    %c0_28 = arith.constant 0 : index
    %48 = memref.load %arg2[%c2_27, %c0_28] : memref<6x4xf32, #tpu.memory_space<smem>>
    %49 = vector.broadcast %48 : f32 to vector<1x128xf32>
    %50 = arith.mulf %1, %49 : vector<1x128xf32>
    %c2_29 = arith.constant 2 : index
    %51 = memref.load %arg3[%c2_29] : memref<6xf32, #tpu.memory_space<smem>>
    %52 = vector.broadcast %51 : f32 to vector<1x128xf32>
    %53 = arith.addf %50, %52 : vector<1x128xf32>
    %c2_30 = arith.constant 2 : index
    %c1_31 = arith.constant 1 : index
    %54 = memref.load %arg2[%c2_30, %c1_31] : memref<6x4xf32, #tpu.memory_space<smem>>
    %55 = vector.broadcast %54 : f32 to vector<1x128xf32>
    %56 = arith.mulf %3, %55 : vector<1x128xf32>
    %57 = arith.addf %53, %56 : vector<1x128xf32>
    %c2_32 = arith.constant 2 : index
    %c2_33 = arith.constant 2 : index
    %58 = memref.load %arg2[%c2_32, %c2_33] : memref<6x4xf32, #tpu.memory_space<smem>>
    %59 = vector.broadcast %58 : f32 to vector<1x128xf32>
    %60 = arith.mulf %5, %59 : vector<1x128xf32>
    %61 = arith.addf %57, %60 : vector<1x128xf32>
    %c2_34 = arith.constant 2 : index
    %c3_35 = arith.constant 3 : index
    %62 = memref.load %arg2[%c2_34, %c3_35] : memref<6x4xf32, #tpu.memory_space<smem>>
    %63 = vector.broadcast %62 : f32 to vector<1x128xf32>
    %64 = arith.mulf %7, %63 : vector<1x128xf32>
    %65 = arith.addf %61, %64 : vector<1x128xf32>
    %cst_36 = arith.constant 0.000000e+00 : f32
    %66 = vector.broadcast %cst_36 : f32 to vector<1x128xf32>
    %67 = arith.maximumf %65, %66 : vector<1x128xf32>
    %c3_37 = arith.constant 3 : index
    %c0_38 = arith.constant 0 : index
    %68 = memref.load %arg2[%c3_37, %c0_38] : memref<6x4xf32, #tpu.memory_space<smem>>
    %69 = vector.broadcast %68 : f32 to vector<1x128xf32>
    %70 = arith.mulf %1, %69 : vector<1x128xf32>
    %c3_39 = arith.constant 3 : index
    %71 = memref.load %arg3[%c3_39] : memref<6xf32, #tpu.memory_space<smem>>
    %72 = vector.broadcast %71 : f32 to vector<1x128xf32>
    %73 = arith.addf %70, %72 : vector<1x128xf32>
    %c3_40 = arith.constant 3 : index
    %c1_41 = arith.constant 1 : index
    %74 = memref.load %arg2[%c3_40, %c1_41] : memref<6x4xf32, #tpu.memory_space<smem>>
    %75 = vector.broadcast %74 : f32 to vector<1x128xf32>
    %76 = arith.mulf %3, %75 : vector<1x128xf32>
    %77 = arith.addf %73, %76 : vector<1x128xf32>
    %c3_42 = arith.constant 3 : index
    %c2_43 = arith.constant 2 : index
    %78 = memref.load %arg2[%c3_42, %c2_43] : memref<6x4xf32, #tpu.memory_space<smem>>
    %79 = vector.broadcast %78 : f32 to vector<1x128xf32>
    %80 = arith.mulf %5, %79 : vector<1x128xf32>
    %81 = arith.addf %77, %80 : vector<1x128xf32>
    %c3_44 = arith.constant 3 : index
    %c3_45 = arith.constant 3 : index
    %82 = memref.load %arg2[%c3_44, %c3_45] : memref<6x4xf32, #tpu.memory_space<smem>>
    %83 = vector.broadcast %82 : f32 to vector<1x128xf32>
    %84 = arith.mulf %7, %83 : vector<1x128xf32>
    %85 = arith.addf %81, %84 : vector<1x128xf32>
    %cst_46 = arith.constant 0.000000e+00 : f32
    %86 = vector.broadcast %cst_46 : f32 to vector<1x128xf32>
    %87 = arith.maximumf %85, %86 : vector<1x128xf32>
    %c4 = arith.constant 4 : index
    %c0_47 = arith.constant 0 : index
    %88 = memref.load %arg2[%c4, %c0_47] : memref<6x4xf32, #tpu.memory_space<smem>>
    %89 = vector.broadcast %88 : f32 to vector<1x128xf32>
    %90 = arith.mulf %1, %89 : vector<1x128xf32>
    %c4_48 = arith.constant 4 : index
    %91 = memref.load %arg3[%c4_48] : memref<6xf32, #tpu.memory_space<smem>>
    %92 = vector.broadcast %91 : f32 to vector<1x128xf32>
    %93 = arith.addf %90, %92 : vector<1x128xf32>
    %c4_49 = arith.constant 4 : index
    %c1_50 = arith.constant 1 : index
    %94 = memref.load %arg2[%c4_49, %c1_50] : memref<6x4xf32, #tpu.memory_space<smem>>
    %95 = vector.broadcast %94 : f32 to vector<1x128xf32>
    %96 = arith.mulf %3, %95 : vector<1x128xf32>
    %97 = arith.addf %93, %96 : vector<1x128xf32>
    %c4_51 = arith.constant 4 : index
    %c2_52 = arith.constant 2 : index
    %98 = memref.load %arg2[%c4_51, %c2_52] : memref<6x4xf32, #tpu.memory_space<smem>>
    %99 = vector.broadcast %98 : f32 to vector<1x128xf32>
    %100 = arith.mulf %5, %99 : vector<1x128xf32>
    %101 = arith.addf %97, %100 : vector<1x128xf32>
    %c4_53 = arith.constant 4 : index
    %c3_54 = arith.constant 3 : index
    %102 = memref.load %arg2[%c4_53, %c3_54] : memref<6x4xf32, #tpu.memory_space<smem>>
    %103 = vector.broadcast %102 : f32 to vector<1x128xf32>
    %104 = arith.mulf %7, %103 : vector<1x128xf32>
    %105 = arith.addf %101, %104 : vector<1x128xf32>
    %cst_55 = arith.constant 0.000000e+00 : f32
    %106 = vector.broadcast %cst_55 : f32 to vector<1x128xf32>
    %107 = arith.maximumf %105, %106 : vector<1x128xf32>
    %c5 = arith.constant 5 : index
    %c0_56 = arith.constant 0 : index
    %108 = memref.load %arg2[%c5, %c0_56] : memref<6x4xf32, #tpu.memory_space<smem>>
    %109 = vector.broadcast %108 : f32 to vector<1x128xf32>
    %110 = arith.mulf %1, %109 : vector<1x128xf32>
    %c5_57 = arith.constant 5 : index
    %111 = memref.load %arg3[%c5_57] : memref<6xf32, #tpu.memory_space<smem>>
    %112 = vector.broadcast %111 : f32 to vector<1x128xf32>
    %113 = arith.addf %110, %112 : vector<1x128xf32>
    %c5_58 = arith.constant 5 : index
    %c1_59 = arith.constant 1 : index
    %114 = memref.load %arg2[%c5_58, %c1_59] : memref<6x4xf32, #tpu.memory_space<smem>>
    %115 = vector.broadcast %114 : f32 to vector<1x128xf32>
    %116 = arith.mulf %3, %115 : vector<1x128xf32>
    %117 = arith.addf %113, %116 : vector<1x128xf32>
    %c5_60 = arith.constant 5 : index
    %c2_61 = arith.constant 2 : index
    %118 = memref.load %arg2[%c5_60, %c2_61] : memref<6x4xf32, #tpu.memory_space<smem>>
    %119 = vector.broadcast %118 : f32 to vector<1x128xf32>
    %120 = arith.mulf %5, %119 : vector<1x128xf32>
    %121 = arith.addf %117, %120 : vector<1x128xf32>
    %c5_62 = arith.constant 5 : index
    %c3_63 = arith.constant 3 : index
    %122 = memref.load %arg2[%c5_62, %c3_63] : memref<6x4xf32, #tpu.memory_space<smem>>
    %123 = vector.broadcast %122 : f32 to vector<1x128xf32>
    %124 = arith.mulf %7, %123 : vector<1x128xf32>
    %125 = arith.addf %121, %124 : vector<1x128xf32>
    %cst_64 = arith.constant 0.000000e+00 : f32
    %126 = vector.broadcast %cst_64 : f32 to vector<1x128xf32>
    %127 = arith.maximumf %125, %126 : vector<1x128xf32>
    %c0_65 = arith.constant 0 : index
    %c0_66 = arith.constant 0 : index
    %128 = memref.load %arg4[%c0_65, %c0_66] : memref<3x6xf32, #tpu.memory_space<smem>>
    %129 = vector.broadcast %128 : f32 to vector<1x128xf32>
    %130 = arith.mulf %27, %129 : vector<1x128xf32>
    %c0_67 = arith.constant 0 : index
    %131 = memref.load %arg5[%c0_67] : memref<3xf32, #tpu.memory_space<smem>>
    %132 = vector.broadcast %131 : f32 to vector<1x128xf32>
    %133 = arith.addf %130, %132 : vector<1x128xf32>
    %c0_68 = arith.constant 0 : index
    %c1_69 = arith.constant 1 : index
    %134 = memref.load %arg4[%c0_68, %c1_69] : memref<3x6xf32, #tpu.memory_space<smem>>
    %135 = vector.broadcast %134 : f32 to vector<1x128xf32>
    %136 = arith.mulf %47, %135 : vector<1x128xf32>
    %137 = arith.addf %133, %136 : vector<1x128xf32>
    %c0_70 = arith.constant 0 : index
    %c2_71 = arith.constant 2 : index
    %138 = memref.load %arg4[%c0_70, %c2_71] : memref<3x6xf32, #tpu.memory_space<smem>>
    %139 = vector.broadcast %138 : f32 to vector<1x128xf32>
    %140 = arith.mulf %67, %139 : vector<1x128xf32>
    %141 = arith.addf %137, %140 : vector<1x128xf32>
    %c0_72 = arith.constant 0 : index
    %c3_73 = arith.constant 3 : index
    %142 = memref.load %arg4[%c0_72, %c3_73] : memref<3x6xf32, #tpu.memory_space<smem>>
    %143 = vector.broadcast %142 : f32 to vector<1x128xf32>
    %144 = arith.mulf %87, %143 : vector<1x128xf32>
    %145 = arith.addf %141, %144 : vector<1x128xf32>
    %c0_74 = arith.constant 0 : index
    %c4_75 = arith.constant 4 : index
    %146 = memref.load %arg4[%c0_74, %c4_75] : memref<3x6xf32, #tpu.memory_space<smem>>
    %147 = vector.broadcast %146 : f32 to vector<1x128xf32>
    %148 = arith.mulf %107, %147 : vector<1x128xf32>
    %149 = arith.addf %145, %148 : vector<1x128xf32>
    %c0_76 = arith.constant 0 : index
    %c5_77 = arith.constant 5 : index
    %150 = memref.load %arg4[%c0_76, %c5_77] : memref<3x6xf32, #tpu.memory_space<smem>>
    %151 = vector.broadcast %150 : f32 to vector<1x128xf32>
    %152 = arith.mulf %127, %151 : vector<1x128xf32>
    %153 = arith.addf %149, %152 : vector<1x128xf32>
    %cst_78 = arith.constant 0.000000e+00 : f32
    %154 = vector.broadcast %cst_78 : f32 to vector<1x128xf32>
    %155 = arith.maximumf %153, %154 : vector<1x128xf32>
    %c1_79 = arith.constant 1 : index
    %c0_80 = arith.constant 0 : index
    %156 = memref.load %arg4[%c1_79, %c0_80] : memref<3x6xf32, #tpu.memory_space<smem>>
    %157 = vector.broadcast %156 : f32 to vector<1x128xf32>
    %158 = arith.mulf %27, %157 : vector<1x128xf32>
    %c1_81 = arith.constant 1 : index
    %159 = memref.load %arg5[%c1_81] : memref<3xf32, #tpu.memory_space<smem>>
    %160 = vector.broadcast %159 : f32 to vector<1x128xf32>
    %161 = arith.addf %158, %160 : vector<1x128xf32>
    %c1_82 = arith.constant 1 : index
    %c1_83 = arith.constant 1 : index
    %162 = memref.load %arg4[%c1_82, %c1_83] : memref<3x6xf32, #tpu.memory_space<smem>>
    %163 = vector.broadcast %162 : f32 to vector<1x128xf32>
    %164 = arith.mulf %47, %163 : vector<1x128xf32>
    %165 = arith.addf %161, %164 : vector<1x128xf32>
    %c1_84 = arith.constant 1 : index
    %c2_85 = arith.constant 2 : index
    %166 = memref.load %arg4[%c1_84, %c2_85] : memref<3x6xf32, #tpu.memory_space<smem>>
    %167 = vector.broadcast %166 : f32 to vector<1x128xf32>
    %168 = arith.mulf %67, %167 : vector<1x128xf32>
    %169 = arith.addf %165, %168 : vector<1x128xf32>
    %c1_86 = arith.constant 1 : index
    %c3_87 = arith.constant 3 : index
    %170 = memref.load %arg4[%c1_86, %c3_87] : memref<3x6xf32, #tpu.memory_space<smem>>
    %171 = vector.broadcast %170 : f32 to vector<1x128xf32>
    %172 = arith.mulf %87, %171 : vector<1x128xf32>
    %173 = arith.addf %169, %172 : vector<1x128xf32>
    %c1_88 = arith.constant 1 : index
    %c4_89 = arith.constant 4 : index
    %174 = memref.load %arg4[%c1_88, %c4_89] : memref<3x6xf32, #tpu.memory_space<smem>>
    %175 = vector.broadcast %174 : f32 to vector<1x128xf32>
    %176 = arith.mulf %107, %175 : vector<1x128xf32>
    %177 = arith.addf %173, %176 : vector<1x128xf32>
    %c1_90 = arith.constant 1 : index
    %c5_91 = arith.constant 5 : index
    %178 = memref.load %arg4[%c1_90, %c5_91] : memref<3x6xf32, #tpu.memory_space<smem>>
    %179 = vector.broadcast %178 : f32 to vector<1x128xf32>
    %180 = arith.mulf %127, %179 : vector<1x128xf32>
    %181 = arith.addf %177, %180 : vector<1x128xf32>
    %cst_92 = arith.constant 0.000000e+00 : f32
    %182 = vector.broadcast %cst_92 : f32 to vector<1x128xf32>
    %183 = arith.maximumf %181, %182 : vector<1x128xf32>
    %c2_93 = arith.constant 2 : index
    %c0_94 = arith.constant 0 : index
    %184 = memref.load %arg4[%c2_93, %c0_94] : memref<3x6xf32, #tpu.memory_space<smem>>
    %185 = vector.broadcast %184 : f32 to vector<1x128xf32>
    %186 = arith.mulf %27, %185 : vector<1x128xf32>
    %c2_95 = arith.constant 2 : index
    %187 = memref.load %arg5[%c2_95] : memref<3xf32, #tpu.memory_space<smem>>
    %188 = vector.broadcast %187 : f32 to vector<1x128xf32>
    %189 = arith.addf %186, %188 : vector<1x128xf32>
    %c2_96 = arith.constant 2 : index
    %c1_97 = arith.constant 1 : index
    %190 = memref.load %arg4[%c2_96, %c1_97] : memref<3x6xf32, #tpu.memory_space<smem>>
    %191 = vector.broadcast %190 : f32 to vector<1x128xf32>
    %192 = arith.mulf %47, %191 : vector<1x128xf32>
    %193 = arith.addf %189, %192 : vector<1x128xf32>
    %c2_98 = arith.constant 2 : index
    %c2_99 = arith.constant 2 : index
    %194 = memref.load %arg4[%c2_98, %c2_99] : memref<3x6xf32, #tpu.memory_space<smem>>
    %195 = vector.broadcast %194 : f32 to vector<1x128xf32>
    %196 = arith.mulf %67, %195 : vector<1x128xf32>
    %197 = arith.addf %193, %196 : vector<1x128xf32>
    %c2_100 = arith.constant 2 : index
    %c3_101 = arith.constant 3 : index
    %198 = memref.load %arg4[%c2_100, %c3_101] : memref<3x6xf32, #tpu.memory_space<smem>>
    %199 = vector.broadcast %198 : f32 to vector<1x128xf32>
    %200 = arith.mulf %87, %199 : vector<1x128xf32>
    %201 = arith.addf %197, %200 : vector<1x128xf32>
    %c2_102 = arith.constant 2 : index
    %c4_103 = arith.constant 4 : index
    %202 = memref.load %arg4[%c2_102, %c4_103] : memref<3x6xf32, #tpu.memory_space<smem>>
    %203 = vector.broadcast %202 : f32 to vector<1x128xf32>
    %204 = arith.mulf %107, %203 : vector<1x128xf32>
    %205 = arith.addf %201, %204 : vector<1x128xf32>
    %c2_104 = arith.constant 2 : index
    %c5_105 = arith.constant 5 : index
    %206 = memref.load %arg4[%c2_104, %c5_105] : memref<3x6xf32, #tpu.memory_space<smem>>
    %207 = vector.broadcast %206 : f32 to vector<1x128xf32>
    %208 = arith.mulf %127, %207 : vector<1x128xf32>
    %209 = arith.addf %205, %208 : vector<1x128xf32>
    %cst_106 = arith.constant 0.000000e+00 : f32
    %210 = vector.broadcast %cst_106 : f32 to vector<1x128xf32>
    %211 = arith.maximumf %209, %210 : vector<1x128xf32>
    %c0_107 = arith.constant 0 : index
    %c0_108 = arith.constant 0 : index
    %212 = memref.load %arg6[%c0_107, %c0_108] : memref<2x3xf32, #tpu.memory_space<smem>>
    %213 = vector.broadcast %212 : f32 to vector<1x128xf32>
    %214 = arith.mulf %155, %213 : vector<1x128xf32>
    %c0_109 = arith.constant 0 : index
    %215 = memref.load %arg7[%c0_109] : memref<2xf32, #tpu.memory_space<smem>>
    %216 = vector.broadcast %215 : f32 to vector<1x128xf32>
    %217 = arith.addf %214, %216 : vector<1x128xf32>
    %c0_110 = arith.constant 0 : index
    %c1_111 = arith.constant 1 : index
    %218 = memref.load %arg6[%c0_110, %c1_111] : memref<2x3xf32, #tpu.memory_space<smem>>
    %219 = vector.broadcast %218 : f32 to vector<1x128xf32>
    %220 = arith.mulf %183, %219 : vector<1x128xf32>
    %221 = arith.addf %217, %220 : vector<1x128xf32>
    %c0_112 = arith.constant 0 : index
    %c2_113 = arith.constant 2 : index
    %222 = memref.load %arg6[%c0_112, %c2_113] : memref<2x3xf32, #tpu.memory_space<smem>>
    %223 = vector.broadcast %222 : f32 to vector<1x128xf32>
    %224 = arith.mulf %211, %223 : vector<1x128xf32>
    %225 = arith.addf %221, %224 : vector<1x128xf32>
    %c1_114 = arith.constant 1 : index
    %c0_115 = arith.constant 0 : index
    %226 = memref.load %arg6[%c1_114, %c0_115] : memref<2x3xf32, #tpu.memory_space<smem>>
    %227 = vector.broadcast %226 : f32 to vector<1x128xf32>
    %228 = arith.mulf %155, %227 : vector<1x128xf32>
    %c1_116 = arith.constant 1 : index
    %229 = memref.load %arg7[%c1_116] : memref<2xf32, #tpu.memory_space<smem>>
    %230 = vector.broadcast %229 : f32 to vector<1x128xf32>
    %231 = arith.addf %228, %230 : vector<1x128xf32>
    %c1_117 = arith.constant 1 : index
    %c1_118 = arith.constant 1 : index
    %232 = memref.load %arg6[%c1_117, %c1_118] : memref<2x3xf32, #tpu.memory_space<smem>>
    %233 = vector.broadcast %232 : f32 to vector<1x128xf32>
    %234 = arith.mulf %183, %233 : vector<1x128xf32>
    %235 = arith.addf %231, %234 : vector<1x128xf32>
    %c1_119 = arith.constant 1 : index
    %c2_120 = arith.constant 2 : index
    %236 = memref.load %arg6[%c1_119, %c2_120] : memref<2x3xf32, #tpu.memory_space<smem>>
    %237 = vector.broadcast %236 : f32 to vector<1x128xf32>
    %238 = arith.mulf %211, %237 : vector<1x128xf32>
    %239 = arith.addf %235, %238 : vector<1x128xf32>
    %c0_121 = arith.constant 0 : index
    %c0_122 = arith.constant 0 : index
    %c0_123 = arith.constant 0 : index
    %240 = vector.load %arg8[%c0_121, %c0_122, %c0_123] : memref<2x1x128xf32, #tpu.memory_space<vmem>>, vector<1x1x128xf32>
    %241 = vector.shape_cast %240 : vector<1x1x128xf32> to vector<1x128xf32>
    %242 = vector.shape_cast %225 : vector<1x128xf32> to vector<1x1x128xf32>
    tpu.vector_store %arg8[%c0_121, %c0_122, %c0_123], %242 {strides = array<i32>} : memref<2x1x128xf32, #tpu.memory_space<vmem>>, vector<1x1x128xf32>,
    %c1_124 = arith.constant 1 : index
    %c0_125 = arith.constant 0 : index
    %c0_126 = arith.constant 0 : index
    %243 = vector.load %arg8[%c1_124, %c0_125, %c0_126] : memref<2x1x128xf32, #tpu.memory_space<vmem>>, vector<1x1x128xf32>
    %244 = vector.shape_cast %243 : vector<1x1x128xf32> to vector<1x128xf32>
    %245 = vector.shape_cast %239 : vector<1x128xf32> to vector<1x1x128xf32>
    tpu.vector_store %arg8[%c1_124, %c0_125, %c0_126], %245 {strides = array<i32>} : memref<2x1x128xf32, #tpu.memory_space<vmem>>, vector<1x1x128xf32>,
    return
  }
  func.func @transform_0(%arg0: i32) -> (i32, i32, i32) {
    %c0_i32 = arith.constant 0 : i32
    %c0_i32_0 = arith.constant 0 : i32
    %c0_i32_1 = arith.constant 0 : i32
    return %c0_i32, %arg0, %c0_i32_0 : i32, i32, i32
  }
  func.func @transform_1(%arg0: i32) -> (i32, i32) {
    %c0_i32 = arith.constant 0 : i32
    %c0_i32_0 = arith.constant 0 : i32
    %c0_i32_1 = arith.constant 0 : i32
    return %c0_i32, %c0_i32_0 : i32, i32
  }
  func.func @transform_2(%arg0: i32) -> i32 {
    %c0_i32 = arith.constant 0 : i32
    %c0_i32_0 = arith.constant 0 : i32
    return %c0_i32 : i32
  }
  func.func @transform_3(%arg0: i32) -> (i32, i32) {
    %c0_i32 = arith.constant 0 : i32
    %c0_i32_0 = arith.constant 0 : i32
    %c0_i32_1 = arith.constant 0 : i32
    return %c0_i32, %c0_i32_0 : i32, i32
  }
  func.func @transform_4(%arg0: i32) -> i32 {
    %c0_i32 = arith.constant 0 : i32
    %c0_i32_0 = arith.constant 0 : i32
    return %c0_i32 : i32
  }
  func.func @transform_5(%arg0: i32) -> (i32, i32) {
    %c0_i32 = arith.constant 0 : i32
    %c0_i32_0 = arith.constant 0 : i32
    %c0_i32_1 = arith.constant 0 : i32
    return %c0_i32, %c0_i32_0 : i32, i32
  }
  func.func @transform_6(%arg0: i32) -> i32 {
    %c0_i32 = arith.constant 0 : i32
    %c0_i32_0 = arith.constant 0 : i32
    return %c0_i32 : i32
  }
  func.func @transform_7(%arg0: i32) -> (i32, i32, i32) {
    %c0_i32 = arith.constant 0 : i32
    %c0_i32_0 = arith.constant 0 : i32
    %c0_i32_1 = arith.constant 0 : i32
    return %c0_i32, %arg0, %c0_i32_0 : i32, i32, i32
  }
}

</mosaic_0001>

<llo_original>
// kernel: tpu_custom_call.1
$region0: #{tpu_custom_call.1}
  #allocation0 [shape = 'u32[]', space=smem, size = 0x4, offset = 0x4, fixed_abs, tag = 'smem constant byte address 0x4 - core index']
  #allocation1 [shape = 'u32[72,128]{1,0:T(1,128)}', space=vmem, size = 0x9000, scoped, tag = 'internal scratch']
  %s0 = inlined_call_operand.vmem [shape: f32[4,1,128], index: 0, kind: input, shape index: {}]
  %s1 = inlined_call_operand.vmem [shape: f32[6,4], index: 1, kind: input, shape index: {}]
  %s2 = inlined_call_operand.vmem [shape: f32[6], index: 2, kind: input, shape index: {}]
  %s3 = inlined_call_operand.vmem [shape: f32[3,6], index: 3, kind: input, shape index: {}]
  %s4 = inlined_call_operand.vmem [shape: f32[3], index: 4, kind: input, shape index: {}]
  %s5 = inlined_call_operand.vmem [shape: f32[2,3], index: 5, kind: input, shape index: {}]
  %s6 = inlined_call_operand.vmem [shape: f32[2], index: 6, kind: input, shape index: {}]
  %s7 = inlined_call_operand.hbm [shape: f32[2,1,128], index: 7, kind: output, shape index: {}]
  %s8 = sld [smem:[#allocation0]]
  $region62: #{tpu_custom_call.1} parent=0
    _
  %s10 = ssub.s32 1, %s8
  %s11 = scalar_select 0, %s10, %s8
  $region1: #{tpu_custom_call.1} parent=0
    #allocation2 [shape = 'u8[4096]{0}', space=smem, size = 0x1000, scoped, tag = 'input window, operand 1, single buffered']
    #allocation3 [shape = 's32[1]{0}', space=sflag, size = 0x4, scoped, tag = 'scoped memory for tpu_custom_call.1']
    #allocation4 [shape = 's32[1]{0}', space=sflag, size = 0x4, scoped, tag = 'scoped memory for tpu_custom_call.1']
    #allocation5 [shape = 'u8[512]{0}', space=smem, size = 0x200, scoped, tag = 'input window, operand 2, single buffered']
    #allocation6 [shape = 's32[1]{0}', space=sflag, size = 0x4, scoped, tag = 'scoped memory for tpu_custom_call.1']
    #allocation7 [shape = 'u8[2048]{0}', space=smem, size = 0x800, scoped, tag = 'input window, operand 3, single buffered']
    #allocation8 [shape = 'u8[512]{0}', space=smem, size = 0x200, scoped, tag = 'input window, operand 4, single buffered']
    #allocation9 [shape = 's32[1]{0}', space=sflag, size = 0x4, scoped, tag = 'scoped memory for tpu_custom_call.1']
    #allocation10 [shape = 'u8[1024]{0}', space=smem, size = 0x400, scoped, tag = 'input window, operand 5, single buffered']
    #allocation11 [shape = 'u8[512]{0}', space=smem, size = 0x200, scoped, tag = 'input window, operand 6, single buffered']
    #allocation12 [shape = 's32[1]{0}', space=sflag, size = 0x4, scoped, tag = 'scoped memory for tpu_custom_call.1']
    #allocation13 [shape = 'u8[1024]{0}', space=vmem, size = 0x400, scoped, tag = 'output window, operand 0, single buffered']
    %12 = vsyncpa [#allocation4], 0
    %13 = vsyncpa [#allocation6], 0
    %14 = vsyncpa [#allocation9], 0
    %15 = vsyncpa [#allocation12], 0
    %16 = vsyncpa [#allocation3], 0
    // Predicated region
    $region2: #{tpu_custom_call.1} parent=1 // pred_check
      _
    $region3: #{tpu_custom_call.1} parent=1 // pred_check_branch
      %18 = sbr.rel (0) target = $region5
    $region4: #{tpu_custom_call.1} parent=1 // pred_region
      _
    $region5: #{tpu_custom_call.1} parent=1 // pred_fallthru
      _
    // Predicated region
    $region6: #{tpu_custom_call.1} parent=1 // pred_check
      _
    $region7: #{tpu_custom_call.1} parent=1 // pred_check_branch
      %20 = sbr.rel (0) target = $region9
    $region8: #{tpu_custom_call.1} parent=1 // pred_region
      %22 = vsyncadd [#allocation4], 0
      %s24 = sshll.u32 %s1, 4
      %s25 = int_to_ptr.vmem [resolvable:$true] %s24
      %27 = dma.vmem_to_smem %s25, 128, [#allocation2], [#allocation4]
    $region9: #{tpu_custom_call.1} parent=1 // pred_fallthru
      _
    // Predicated region
    $region10: #{tpu_custom_call.1} parent=1 // pred_check
      _
    $region11: #{tpu_custom_call.1} parent=1 // pred_check_branch
      %29 = sbr.rel (0) target = $region13
    $region12: #{tpu_custom_call.1} parent=1 // pred_region
      %31 = vsyncadd [#allocation6], 0
      %s33 = sshll.u32 %s2, 4
      %s34 = int_to_ptr.vmem [resolvable:$true] %s33
      %36 = dma.vmem_to_smem %s34, 16, [#allocation5], [#allocation6]
    $region13: #{tpu_custom_call.1} parent=1 // pred_fallthru
      _
    // Predicated region
    $region14: #{tpu_custom_call.1} parent=1 // pred_check
      _
    $region15: #{tpu_custom_call.1} parent=1 // pred_check_branch
      %38 = sbr.rel (0) target = $region17
    $region16: #{tpu_custom_call.1} parent=1 // pred_region
      %40 = vsyncadd [#allocation6], 0
      %s42 = sshll.u32 %s3, 4
      %s43 = int_to_ptr.vmem [resolvable:$true] %s42
      %45 = dma.vmem_to_smem %s43, 64, [#allocation7], [#allocation6]
    $region17: #{tpu_custom_call.1} parent=1 // pred_fallthru
      _
    // Predicated region
    $region18: #{tpu_custom_call.1} parent=1 // pred_check
      _
    $region19: #{tpu_custom_call.1} parent=1 // pred_check_branch
      %47 = sbr.rel (0) target = $region21
    $region20: #{tpu_custom_call.1} parent=1 // pred_region
      %49 = vsyncadd [#allocation9], 0
      %s51 = sshll.u32 %s4, 4
      %s52 = int_to_ptr.vmem [resolvable:$true] %s51
      %54 = dma.vmem_to_smem %s52, 16, [#allocation8], [#allocation9]
    $region21: #{tpu_custom_call.1} parent=1 // pred_fallthru
      _
    // Predicated region
    $region22: #{tpu_custom_call.1} parent=1 // pred_check
      _
    $region23: #{tpu_custom_call.1} parent=1 // pred_check_branch
      %56 = sbr.rel (0) target = $region25
    $region24: #{tpu_custom_call.1} parent=1 // pred_region
      %58 = vsyncadd [#allocation9], 0
      %s60 = sshll.u32 %s5, 4
      %s61 = int_to_ptr.vmem [resolvable:$true] %s60
      %63 = dma.vmem_to_smem %s61, 32, [#allocation10], [#allocation9]
    $region25: #{tpu_custom_call.1} parent=1 // pred_fallthru
      _
    // Predicated region
    $region26: #{tpu_custom_call.1} parent=1 // pred_check
      _
    $region27: #{tpu_custom_call.1} parent=1 // pred_check_branch
      %65 = sbr.rel (0) target = $region29
    $region28: #{tpu_custom_call.1} parent=1 // pred_region
      %67 = vsyncadd [#allocation12], 0
      %s69 = sshll.u32 %s6, 4
      %s70 = int_to_ptr.vmem [resolvable:$true] %s69
      %72 = dma.vmem_to_smem %s70, 16, [#allocation11], [#allocation12]
    $region29: #{tpu_custom_call.1} parent=1 // pred_fallthru
      _
    // Predicated region
    $region30: #{tpu_custom_call.1} parent=1 // pred_check
      _
    $region31: #{tpu_custom_call.1} parent=1 // pred_check_branch
      %74 = sbr.rel (0) target = $region33
    $region32: #{tpu_custom_call.1} parent=1 // pred_region
      %76 = dma.done [#allocation4], 128
    $region33: #{tpu_custom_call.1} parent=1 // pred_fallthru
      _
    // Predicated region
    $region34: #{tpu_custom_call.1} parent=1 // pred_check
      _
    $region35: #{tpu_custom_call.1} parent=1 // pred_check_branch
      %78 = sbr.rel (0) target = $region37
    $region36: #{tpu_custom_call.1} parent=1 // pred_region
      %80 = dma.done [#allocation6], 16
    $region37: #{tpu_custom_call.1} parent=1 // pred_fallthru
      _
    // Predicated region
    $region38: #{tpu_custom_call.1} parent=1 // pred_check
      _
    $region39: #{tpu_custom_call.1} parent=1 // pred_check_branch
      %82 = sbr.rel (0) target = $region41
    $region40: #{tpu_custom_call.1} parent=1 // pred_region
      %84 = dma.done [#allocation6], 64
    $region41: #{tpu_custom_call.1} parent=1 // pred_fallthru
      _
    // Predicated region
    $region42: #{tpu_custom_call.1} parent=1 // pred_check
      _
    $region43: #{tpu_custom_call.1} parent=1 // pred_check_branch
      %86 = sbr.rel (0) target = $region45
    $region44: #{tpu_custom_call.1} parent=1 // pred_region
      %88 = dma.done [#allocation9], 16
    $region45: #{tpu_custom_call.1} parent=1 // pred_fallthru
      _
    // Predicated region
    $region46: #{tpu_custom_call.1} parent=1 // pred_check
      _
    $region47: #{tpu_custom_call.1} parent=1 // pred_check_branch
      %90 = sbr.rel (0) target = $region49
    $region48: #{tpu_custom_call.1} parent=1 // pred_region
      %92 = dma.done [#allocation9], 32
    $region49: #{tpu_custom_call.1} parent=1 // pred_fallthru
      _
    // Predicated region
    $region50: #{tpu_custom_call.1} parent=1 // pred_check
      _
    $region51: #{tpu_custom_call.1} parent=1 // pred_check_branch
      %94 = sbr.rel (0) target = $region53
    $region52: #{tpu_custom_call.1} parent=1 // pred_region
      %96 = dma.done [#allocation12], 16
    $region53: #{tpu_custom_call.1} parent=1 // pred_fallthru
      _
    %97 = sfence
    %v98 = vld [vmem:[%s0] sm:$0x1]
    %s99 = scalar_lea.vmem %s0, 1
    %v100 = vld [vmem:[%s99] sm:$0x1]
    %s101 = scalar_lea.vmem %s0, 2
    %v102 = vld [vmem:[%s101] sm:$0x1]
    %s103 = scalar_lea.vmem %s0, 3
    %v104 = vld [vmem:[%s103] sm:$0x1]
    %s105 = sld [smem:[#allocation2]]
    %v106 = vstv %s105
    %v107 = vmul.f32 %v98, %v106
    %s108 = sld [smem:[#allocation5]]
    %v109 = vstv %s108
    %v110 = vadd.f32 %v107, %v109
    %s111 = sld [smem:[#allocation2 + $0x1]]
    %v112 = vstv %s111
    %v113 = vmul.f32 %v100, %v112
    %v114 = vadd.f32 %v110, %v113
    %s115 = sld [smem:[#allocation2 + $0x2]]
    %v116 = vstv %s115
    %v117 = vmul.f32 %v102, %v116
    %v118 = vadd.f32 %v114, %v117
    %s119 = sld [smem:[#allocation2 + $0x3]]
    %v120 = vstv %s119
    %v121 = vmul.f32 %v104, %v120
    %v122 = vadd.f32 %v118, %v121
    %v123 = vmax.f32 %v122, 0.0
    %s124 = sld [smem:[#allocation2 + $0x80]]
    %v125 = vstv %s124
    %v126 = vmul.f32 %v98, %v125
    %s127 = sld [smem:[#allocation5 + $0x1]]
    %v128 = vstv %s127
    %v129 = vadd.f32 %v126, %v128
    %s130 = sld [smem:[#allocation2 + $0x81]]
    %v131 = vstv %s130
    %v132 = vmul.f32 %v100, %v131
    %v133 = vadd.f32 %v129, %v132
    %s134 = sld [smem:[#allocation2 + $0x82]]
    %v135 = vstv %s134
    %v136 = vmul.f32 %v102, %v135
    %v137 = vadd.f32 %v133, %v136
    %s138 = sld [smem:[#allocation2 + $0x83]]
    %v139 = vstv %s138
    %v140 = vmul.f32 %v104, %v139
    %v141 = vadd.f32 %v137, %v140
    %v142 = vmax.f32 %v141, 0.0
    %s143 = sld [smem:[#allocation2 + $0x100]]
    %v144 = vstv %s143
    %v145 = vmul.f32 %v98, %v144
    %s146 = sld [smem:[#allocation5 + $0x2]]
    %v147 = vstv %s146
    %v148 = vadd.f32 %v145, %v147
    %s149 = sld [smem:[#allocation2 + $0x101]]
    %v150 = vstv %s149
    %v151 = vmul.f32 %v100, %v150
    %v152 = vadd.f32 %v148, %v151
    %s153 = sld [smem:[#allocation2 + $0x102]]
    %v154 = vstv %s153
    %v155 = vmul.f32 %v102, %v154
    %v156 = vadd.f32 %v152, %v155
    %s157 = sld [smem:[#allocation2 + $0x103]]
    %v158 = vstv %s157
    %v159 = vmul.f32 %v104, %v158
    %v160 = vadd.f32 %v156, %v159
    %v161 = vmax.f32 %v160, 0.0
    %s162 = sld [smem:[#allocation2 + $0x180]]
    %v163 = vstv %s162
    %v164 = vmul.f32 %v98, %v163
    %s165 = sld [smem:[#allocation5 + $0x3]]
    %v166 = vstv %s165
    %v167 = vadd.f32 %v164, %v166
    %s168 = sld [smem:[#allocation2 + $0x181]]
    %v169 = vstv %s168
    %v170 = vmul.f32 %v100, %v169
    %v171 = vadd.f32 %v167, %v170
    %s172 = sld [smem:[#allocation2 + $0x182]]
    %v173 = vstv %s172
    %v174 = vmul.f32 %v102, %v173
    %v175 = vadd.f32 %v171, %v174
    %s176 = sld [smem:[#allocation2 + $0x183]]
    %v177 = vstv %s176
    %v178 = vmul.f32 %v104, %v177
    %v179 = vadd.f32 %v175, %v178
    %v180 = vmax.f32 %v179, 0.0
    %s181 = sld [smem:[#allocation2 + $0x200]]
    %v182 = vstv %s181
    %v183 = vmul.f32 %v98, %v182
    %s184 = sld [smem:[#allocation5 + $0x4]]
    %v185 = vstv %s184
    %v186 = vadd.f32 %v183, %v185
    %s187 = sld [smem:[#allocation2 + $0x201]]
    %v188 = vstv %s187
    %v189 = vmul.f32 %v100, %v188
    %v190 = vadd.f32 %v186, %v189
    %s191 = sld [smem:[#allocation2 + $0x202]]
    %v192 = vstv %s191
    %v193 = vmul.f32 %v102, %v192
    %v194 = vadd.f32 %v190, %v193
    %s195 = sld [smem:[#allocation2 + $0x203]]
    %v196 = vstv %s195
    %v197 = vmul.f32 %v104, %v196
    %v198 = vadd.f32 %v194, %v197
    %v199 = vmax.f32 %v198, 0.0
    %s200 = sld [smem:[#allocation2 + $0x280]]
    %v201 = vstv %s200
    %v202 = vmul.f32 %v98, %v201
    %s203 = sld [smem:[#allocation5 + $0x5]]
    %v204 = vstv %s203
    %v205 = vadd.f32 %v202, %v204
    %s206 = sld [smem:[#allocation2 + $0x281]]
    %v207 = vstv %s206
    %v208 = vmul.f32 %v100, %v207
    %v209 = vadd.f32 %v205, %v208
    %s210 = sld [smem:[#allocation2 + $0x282]]
    %v211 = vstv %s210
    %v212 = vmul.f32 %v102, %v211
    %v213 = vadd.f32 %v209, %v212
    %s214 = sld [smem:[#allocation2 + $0x283]]
    %v215 = vstv %s214
    %v216 = vmul.f32 %v104, %v215
    %v217 = vadd.f32 %v213, %v216
    %v218 = vmax.f32 %v217, 0.0
    %s219 = sld [smem:[#allocation7]]
    %v220 = vstv %s219
    %v221 = vmul.f32 %v123, %v220
    %s222 = sld [smem:[#allocation8]]
    %v223 = vstv %s222
    %v224 = vadd.f32 %v221, %v223
    %s225 = sld [smem:[#allocation7 + $0x1]]
    %v226 = vstv %s225
    %v227 = vmul.f32 %v142, %v226
    %v228 = vadd.f32 %v224, %v227
    %s229 = sld [smem:[#allocation7 + $0x2]]
    %v230 = vstv %s229
    %v231 = vmul.f32 %v161, %v230
    %v232 = vadd.f32 %v228, %v231
    %s233 = sld [smem:[#allocation7 + $0x3]]
    %v234 = vstv %s233
    %v235 = vmul.f32 %v180, %v234
    %v236 = vadd.f32 %v232, %v235
    %s237 = sld [smem:[#allocation7 + $0x4]]
    %v238 = vstv %s237
    %v239 = vmul.f32 %v199, %v238
    %v240 = vadd.f32 %v236, %v239
    %s241 = sld [smem:[#allocation7 + $0x5]]
    %v242 = vstv %s241
    %v243 = vmul.f32 %v218, %v242
    %v244 = vadd.f32 %v240, %v243
    %v245 = vmax.f32 %v244, 0.0
    %s246 = sld [smem:[#allocation7 + $0x80]]
    %v247 = vstv %s246
    %v248 = vmul.f32 %v123, %v247
    %s249 = sld [smem:[#allocation8 + $0x1]]
    %v250 = vstv %s249
    %v251 = vadd.f32 %v248, %v250
    %s252 = sld [smem:[#allocation7 + $0x81]]
    %v253 = vstv %s252
    %v254 = vmul.f32 %v142, %v253
    %v255 = vadd.f32 %v251, %v254
    %s256 = sld [smem:[#allocation7 + $0x82]]
    %v257 = vstv %s256
    %v258 = vmul.f32 %v161, %v257
    %v259 = vadd.f32 %v255, %v258
    %s260 = sld [smem:[#allocation7 + $0x83]]
    %v261 = vstv %s260
    %v262 = vmul.f32 %v180, %v261
    %v263 = vadd.f32 %v259, %v262
    %s264 = sld [smem:[#allocation7 + $0x84]]
    %v265 = vstv %s264
    %v266 = vmul.f32 %v199, %v265
    %v267 = vadd.f32 %v263, %v266
    %s268 = sld [smem:[#allocation7 + $0x85]]
    %v269 = vstv %s268
    %v270 = vmul.f32 %v218, %v269
    %v271 = vadd.f32 %v267, %v270
    %v272 = vmax.f32 %v271, 0.0
    %s273 = sld [smem:[#allocation7 + $0x100]]
    %v274 = vstv %s273
    %v275 = vmul.f32 %v123, %v274
    %s276 = sld [smem:[#allocation8 + $0x2]]
    %v277 = vstv %s276
    %v278 = vadd.f32 %v275, %v277
    %s279 = sld [smem:[#allocation7 + $0x101]]
    %v280 = vstv %s279
    %v281 = vmul.f32 %v142, %v280
    %v282 = vadd.f32 %v278, %v281
    %s283 = sld [smem:[#allocation7 + $0x102]]
    %v284 = vstv %s283
    %v285 = vmul.f32 %v161, %v284
    %v286 = vadd.f32 %v282, %v285
    %s287 = sld [smem:[#allocation7 + $0x103]]
    %v288 = vstv %s287
    %v289 = vmul.f32 %v180, %v288
    %v290 = vadd.f32 %v286, %v289
    %s291 = sld [smem:[#allocation7 + $0x104]]
    %v292 = vstv %s291
    %v293 = vmul.f32 %v199, %v292
    %v294 = vadd.f32 %v290, %v293
    %s295 = sld [smem:[#allocation7 + $0x105]]
    %v296 = vstv %s295
    %v297 = vmul.f32 %v218, %v296
    %v298 = vadd.f32 %v294, %v297
    %v299 = vmax.f32 %v298, 0.0
    %s300 = sld [smem:[#allocation10]]
    %v301 = vstv %s300
    %v302 = vmul.f32 %v245, %v301
    %s303 = sld [smem:[#allocation11]]
    %v304 = vstv %s303
    %v305 = vadd.f32 %v302, %v304
    %s306 = sld [smem:[#allocation10 + $0x1]]
    %v307 = vstv %s306
    %v308 = vmul.f32 %v272, %v307
    %v309 = vadd.f32 %v305, %v308
    %s310 = sld [smem:[#allocation10 + $0x2]]
    %v311 = vstv %s310
    %v312 = vmul.f32 %v299, %v311
    %v313 = vadd.f32 %v309, %v312
    %s314 = sld [smem:[#allocation10 + $0x80]]
    %v315 = vstv %s314
    %v316 = vmul.f32 %v245, %v315
    %s317 = sld [smem:[#allocation11 + $0x1]]
    %v318 = vstv %s317
    %v319 = vadd.f32 %v316, %v318
    %s320 = sld [smem:[#allocation10 + $0x81]]
    %v321 = vstv %s320
    %v322 = vmul.f32 %v272, %v321
    %v323 = vadd.f32 %v319, %v322
    %s324 = sld [smem:[#allocation10 + $0x82]]
    %v325 = vstv %s324
    %v326 = vmul.f32 %v299, %v325
    %v327 = vadd.f32 %v323, %v326
    %328 = vst [vmem:[#allocation13] sm:$0x1] %v313
    %s329 = scalar_lea.vmem [#allocation13], 1
    %330 = vst [vmem:[%s329] sm:$0x1] %v327
    // Predicated region
    $region54: #{tpu_custom_call.1} parent=1 // pred_check
      _
    $region55: #{tpu_custom_call.1} parent=1 // pred_check_branch
      %332 = sbr.rel (0) target = $region57
    $region56: #{tpu_custom_call.1} parent=1 // pred_region
      %334 = vsyncadd [#allocation3], 0
      %s335 = sshll.u32 [#allocation13], 4
      %s336 = int_to_ptr.vmem [resolvable:$true] %s335
      %s337 = sshll.u32 %s7, 4
      %s338 = int_to_ptr.hbm [resolvable:$true] %s337
      %343 = dma.vmem_to_hbm [thread:$0]  %s336, 32, %s338, [#allocation3], 16, 16, 1
    $region57: #{tpu_custom_call.1} parent=1 // pred_fallthru
      _
    // Predicated region
    $region58: #{tpu_custom_call.1} parent=1 // pred_check
      _
    $region59: #{tpu_custom_call.1} parent=1 // pred_check_branch
      %345 = sbr.rel (0) target = $region61
    $region60: #{tpu_custom_call.1} parent=1 // pred_region
      %347 = dma.done [#allocation3], 32
    $region61: #{tpu_custom_call.1} parent=1 // pred_fallthru
      _
    %348 = vsyncpa [#allocation3], 1
    %349 = vsyncpa [#allocation4], 1
    %350 = vsyncpa [#allocation6], 1
    %351 = vsyncpa [#allocation9], 1
    %352 = vsyncpa [#allocation12], 1

</llo_original>
